<compile_context>
chip_gen: v7x
topology: tpu7x:2x2x1
jax: 0.10.0
libtpu: 0.0.40
codegen_flags: <defaults>
</compile_context>

<pallas_src>
import functools

import jax
import jax.numpy as jnp
import numpy as np
from jax.experimental import pallas as pl
from jax.experimental.pallas import tpu as pltpu

C_REG = 0.01          # L2Attack.c
FEATURE_DIM = 128     # synthetic embedding dim (lane-dense)


def _pick_tk(d, max_tk):
    """Largest multiple of 128 that divides d and is <= max_tk (else full d)."""
    if d % 128 != 0:
        return d
    best = 128
    k = 128
    while k <= min(d, max_tk):
        if d % k == 0:
            best = k
        k += 128
    return best


# -----------------------------------------------------------------------------
# Fused kernel: per D-tile k
#   d        = tanh(delta_tile)                       (1, tk)
#   x_adv    = clip(img_tile + d, 0, 1)               (B, tk)
#   acc_adv += x_adv_bf16 @ W'_bf16                   (B, F) f32 accumulate
#   acc_cln += img_bf16   @ W'_bf16                   (B, F) f32 accumulate
#   nsq     += sum(d^2)
# Finalize (last grid step): add folded-normalization bias, L2-normalize features,
# cosine, loss = mean(cos) + c*||delta||_2.
# -----------------------------------------------------------------------------
def _l2attack_kernel(img_ref, delta_ref, w_ref, bias_ref,
                     loss_ref, cos_ref, l2_ref,
                     acc_adv, acc_cln, nsq, *, c):
    k = pl.program_id(0)

    @pl.when(k == 0)
    def _init():
        acc_adv[...] = jnp.zeros_like(acc_adv)
        acc_cln[...] = jnp.zeros_like(acc_cln)
        nsq[...] = jnp.zeros_like(nsq)

    d = jnp.tanh(delta_ref[...])                     # (1, tk) f32, EUP
    img = img_ref[...]                               # (B, tk) f32
    x_adv = jnp.clip(img + d, 0.0, 1.0)              # adversarial image tile

    w = w_ref[...]                                   # (tk, F) bf16 (normalization folded)
    acc_adv[...] += jnp.dot(x_adv.astype(jnp.bfloat16), w,
                            preferred_element_type=jnp.float32)
    acc_cln[...] += jnp.dot(img.astype(jnp.bfloat16), w,
                            preferred_element_type=jnp.float32)
    nsq[...] += jnp.sum(d * d, axis=1, keepdims=True)   # (1, 1)

    @pl.when(k == pl.num_programs(0) - 1)
    def _finalize():
        b = bias_ref[...]                            # (1, F) f32
        fa = acc_adv[...] + b                        # adv features   (B, F)
        fx = acc_cln[...] + b                        # clean features (B, F)
        fa = fa * jax.lax.rsqrt(jnp.sum(fa * fa, axis=1, keepdims=True))
        fx = fx * jax.lax.rsqrt(jnp.sum(fx * fx, axis=1, keepdims=True))
        cos = jnp.sum(fa * fx, axis=1, keepdims=True)        # (B, 1) cos_loss
        cos_mean = jnp.mean(cos, axis=0, keepdims=True)      # (1, 1)
        l2 = jnp.sqrt(nsq[...])                              # (1, 1) ||delta||_2
        loss_ref[...] = cos_mean + c * l2                    # mean(cos + c*norm)
        cos_ref[...] = cos_mean
        l2_ref[...] = l2


# -----------------------------------------------------------------------------
# Host-side prep (call ONCE and cache across attack iterations).
# -----------------------------------------------------------------------------
def prepare_l2attack(w_proj, mean_c, std_c, H, W):
    """Fold per-channel (x-mean)/std into the linear encoder in f32, then cast bf16."""
    D, F = w_proj.shape
    hw = H * W
    inv_std_flat = jnp.repeat(1.0 / std_c.astype(jnp.float32), hw)   # (D,)
    mean_flat = jnp.repeat(mean_c.astype(jnp.float32), hw)           # (D,)
    w_folded_f32 = w_proj.astype(jnp.float32) * inv_std_flat[:, None]
    bias = -(mean_flat @ w_folded_f32)                               # (F,) f32
    return w_folded_f32.astype(jnp.bfloat16), bias.reshape(1, F)


def prepare_images(images_nchw):
    """Flatten NCHW -> (B, D) once per image batch (constant across attack steps)."""
    B = images_nchw.shape[0]
    return images_nchw.reshape(B, -1).astype(jnp.float32)


# -----------------------------------------------------------------------------
# Per-attack-step forward.
# -----------------------------------------------------------------------------
def l2attack_forward(images_flat, delta_param_nchw, w_folded_bf16, bias, *,
                     c=C_REG, tk=None, max_tk=24576,
                     vmem_limit_bytes=48 * 1024 * 1024):
    """Pallas implementation of L2Attack.forward (untargeted branch)."""
    B, D = images_flat.shape
    F = w_folded_bf16.shape[1]
    delta_flat = delta_param_nchw.reshape(1, D).astype(jnp.float32)

    if tk is None:
        # Default yields tk=21504 (kt=7) at production D=3*224*224: ~11 MiB of
        # double-buffered bf16 weight tiles -> fits v7x's 64 MiB VMEM.  On v6e the
        # cap can be raised (e.g. max_tk=40960 -> tk=37632, kt=4).
        tk = _pick_tk(D, max_tk)
    assert D % tk == 0, (D, tk)
    kt = D // tk

    # TODO(synk): at production batch sizes (B >= ~64) stream images as bf16 and
    # shrink tk so the (B, tk) double-buffered tile stays within VMEM.
    kernel = functools.partial(_l2attack_kernel, c=c)

    grid_spec = pltpu.PrefetchScalarGridSpec(
        num_scalar_prefetch=0,
        grid=(kt,),
        in_specs=[
            pl.BlockSpec((B, tk), lambda k: (0, k)),      # images (f32)
            pl.BlockSpec((1, tk), lambda k: (0, k)),      # delta_param (f32)
            pl.BlockSpec((tk, F), lambda k: (k, 0)),      # folded weights (bf16)
            pl.BlockSpec((1, F), lambda k: (0, 0)),       # folded bias (f32, resident)
        ],
        out_specs=[
            pl.BlockSpec((1, 1), lambda k: (0, 0)),       # loss
            pl.BlockSpec((1, 1), lambda k: (0, 0)),       # cos mean
            pl.BlockSpec((1, 1), lambda k: (0, 0)),       # l2
        ],
        scratch_shapes=[
            pltpu.VMEM((B, F), jnp.float32),              # adv feature accumulator
            pltpu.VMEM((B, F), jnp.float32),              # clean feature accumulator
            pltpu.VMEM((1, 1), jnp.float32),              # sum(tanh(delta)^2)
        ],
    )

    loss, cos_mean, l2 = pl.pallas_call(
        kernel,
        grid_spec=grid_spec,
        out_shape=[
            jax.ShapeDtypeStruct((1, 1), jnp.float32),
            jax.ShapeDtypeStruct((1, 1), jnp.float32),
            jax.ShapeDtypeStruct((1, 1), jnp.float32),
        ],
        compiler_params=pltpu.CompilerParams(
            dimension_semantics=("arbitrary",),           # D is a reduction axis
            vmem_limit_bytes=vmem_limit_bytes,
        ),
    )(images_flat, delta_flat, w_folded_bf16, bias)

    return {
        "loss": loss[0, 0],
        "cos_loss": cos_mean[0, 0],
        "l2": l2[0, 0],
    }


# -----------------------------------------------------------------------------
# Pure-JAX reference (mirrors the PyTorch forward, untargeted branch).
# Uses the same folded-weight bf16 / f32-accumulate recipe as the kernel so the
# comparison isolates kernel correctness from bf16 quantization; for the linear
# synthetic encoder, folding normalization into W is mathematically exact.
# -----------------------------------------------------------------------------
def _reference(images_nchw, delta_param_nchw, w_folded_bf16, bias, c):
    delta = jnp.tanh(delta_param_nchw)                   # (1, C, H, W)
    x_adv = jnp.clip(images_nchw + delta, 0.0, 1.0)

    def encode(x):
        xf = x.reshape(x.shape[0], -1)
        f = jnp.dot(xf.astype(jnp.bfloat16), w_folded_bf16,
                    preferred_element_type=jnp.float32) + bias
        return f / jnp.linalg.norm(f, axis=1, keepdims=True)

    fa = encode(x_adv)
    fx = encode(images_nchw)
    cos = jnp.sum(fa * fx, axis=1)                       # (B,)
    norm = jnp.sqrt(jnp.sum(delta ** 2))                 # ||delta||_2 over [1,2,3]
    loss = jnp.mean(cos + c * norm)
    return loss, jnp.mean(cos), norm


if __name__ == "__main__":
    key = jax.random.PRNGKey(0)
    k_img, k_delta, k_w = jax.random.split(key, 3)

    B, C, H, W = 2, 3, 16, 16          # small image_size for the synthetic test
    D = C * H * W

    images = jax.random.uniform(k_img, (B, C, H, W), jnp.float32, 0.0, 1.0)
    # nn.Parameter delta: FloatTensor(1, 3, image_size, image_size).uniform_(-0.5, 0.5)
    delta_param = jax.random.uniform(k_delta, (1, C, H, W), jnp.float32, -0.5, 0.5)
    w_proj = jax.random.normal(k_w, (D, FEATURE_DIM), jnp.float32) * 0.05

    mean_c = jnp.array([0.48145466, 0.4578275, 0.40821073], jnp.float32)
    std_c = jnp.array([0.26862954, 0.26130258, 0.27577711], jnp.float32)

    # One-time host prep (cached across attack iterations in real use).
    w_folded_bf16, bias = prepare_l2attack(w_proj, mean_c, std_c, H, W)
    images_flat = prepare_images(images)

    # tk=256 -> 3 grid steps over D=768, exercising the tiled-reduction pipeline.
    results = l2attack_forward(images_flat, delta_param, w_folded_bf16, bias, tk=256)
    results = jax.tree_util.tree_map(jax.block_until_ready, results)

    ref_loss, ref_cos, ref_l2 = _reference(images, delta_param, w_folded_bf16, bias, C_REG)
    np.testing.assert_allclose(np.asarray(results["loss"]), np.asarray(ref_loss),
                               rtol=2e-3, atol=2e-3)
    np.testing.assert_allclose(np.asarray(results["cos_loss"]), np.asarray(ref_cos),
                               rtol=2e-3, atol=2e-3)
    np.testing.assert_allclose(np.asarray(results["l2"]), np.asarray(ref_l2),
                               rtol=1e-3, atol=1e-4)

    print("KERNEL_OK")
</pallas_src>

<mosaic_0001>
module attributes {stable_mosaic.version = 11 : i64} {
  func.func @_l2attack_kernel(%arg0: i32, %arg1: memref<2x256xf32, #tpu.memory_space<vmem>>, %arg2: memref<1x256xf32, #tpu.memory_space<vmem>>, %arg3: memref<256x128xbf16, #tpu.memory_space<vmem>>, %arg4: memref<1x128xf32, #tpu.memory_space<vmem>>, %arg5: memref<1x1xf32, #tpu.memory_space<vmem>>, %arg6: memref<1x1xf32, #tpu.memory_space<vmem>>, %arg7: memref<1x1xf32, #tpu.memory_space<vmem>>, %arg8: memref<2x128xf32, #tpu.memory_space<vmem>>, %arg9: memref<2x128xf32, #tpu.memory_space<vmem>>, %arg10: memref<1x1xf32, #tpu.memory_space<vmem>>) attributes {dimension_semantics = [#tpu.dimension_semantics<arbitrary>], iteration_bounds = array<i64: 3>, scalar_prefetch = 0 : i64, scratch_operands = 3 : i64, tpu.core_type = #tpu.core_type<tc>, window_params = [{transform_indices = @transform_0, window_bounds = array<i64: 2, 256>}, {transform_indices = @transform_1, window_bounds = array<i64: 1, 256>}, {transform_indices = @transform_2, window_bounds = array<i64: 256, 128>}, {pipeline_mode = #tpu.pipeline_mode<synchronous>, transform_indices = @transform_3, window_bounds = array<i64: 1, 128>}, {pipeline_mode = #tpu.pipeline_mode<synchronous>, transform_indices = @transform_4, window_bounds = array<i64: 1, 1>}, {pipeline_mode = #tpu.pipeline_mode<synchronous>, transform_indices = @transform_5, window_bounds = array<i64: 1, 1>}, {pipeline_mode = #tpu.pipeline_mode<synchronous>, transform_indices = @transform_6, window_bounds = array<i64: 1, 1>}]} {
    %c0_i32 = arith.constant 0 : i32
    %0 = arith.cmpi eq, %arg0, %c0_i32 : i32
    %1 = arith.extui %0 : i1 to i32
    %c0_i32_0 = arith.constant 0 : i32
    %2 = arith.cmpi ne, %1, %c0_i32_0 : i32
    scf.if %2 {
      %cst_23 = arith.constant 0.000000e+00 : f32
      %32 = vector.broadcast %cst_23 : f32 to vector<2x128xf32>
      %c0_24 = arith.constant 0 : index
      %c0_25 = arith.constant 0 : index
      %33 = vector.load %arg8[%c0_24, %c0_25] : memref<2x128xf32, #tpu.memory_space<vmem>>, vector<2x128xf32>
      tpu.vector_store %arg8[%c0_24, %c0_25], %32 {strides = array<i32>} : memref<2x128xf32, #tpu.memory_space<vmem>>, vector<2x128xf32>,
      %cst_26 = arith.constant 0.000000e+00 : f32
      %34 = vector.broadcast %cst_26 : f32 to vector<2x128xf32>
      %c0_27 = arith.constant 0 : index
      %c0_28 = arith.constant 0 : index
      %35 = vector.load %arg9[%c0_27, %c0_28] : memref<2x128xf32, #tpu.memory_space<vmem>>, vector<2x128xf32>
      tpu.vector_store %arg9[%c0_27, %c0_28], %34 {strides = array<i32>} : memref<2x128xf32, #tpu.memory_space<vmem>>, vector<2x128xf32>,
      %cst_29 = arith.constant 0.000000e+00 : f32
      %36 = vector.broadcast %cst_29 : f32 to vector<1x1xf32>
      %c0_30 = arith.constant 0 : index
      %c0_31 = arith.constant 0 : index
      %37 = vector.load %arg10[%c0_30, %c0_31] : memref<1x1xf32, #tpu.memory_space<vmem>>, vector<1x1xf32>
      tpu.vector_store %arg10[%c0_30, %c0_31], %36 {strides = array<i32>} : memref<1x1xf32, #tpu.memory_space<vmem>>, vector<1x1xf32>,
    } else {
    }
    %c0 = arith.constant 0 : index
    %c0_1 = arith.constant 0 : index
    %3 = vector.load %arg2[%c0, %c0_1] : memref<1x256xf32, #tpu.memory_space<vmem>>, vector<1x256xf32>
    %4 = math.tanh %3 : vector<1x256xf32>
    %c0_2 = arith.constant 0 : index
    %c0_3 = arith.constant 0 : index
    %5 = vector.load %arg1[%c0_2, %c0_3] : memref<2x256xf32, #tpu.memory_space<vmem>>, vector<2x256xf32>
    %6 = vector.broadcast %4 : vector<1x256xf32> to vector<2x256xf32>
    %7 = arith.addf %5, %6 : vector<2x256xf32>
    %cst = arith.constant 0.000000e+00 : f32
    %cst_4 = arith.constant 1.000000e+00 : f32
    %8 = vector.broadcast %cst : f32 to vector<2x256xf32>
    %9 = arith.maximumf %8, %7 : vector<2x256xf32>
    %10 = vector.broadcast %cst_4 : f32 to vector<2x256xf32>
    %11 = arith.minimumf %10, %9 : vector<2x256xf32>
    %c0_5 = arith.constant 0 : index
    %c0_6 = arith.constant 0 : index
    %12 = vector.load %arg3[%c0_5, %c0_6] : memref<256x128xbf16, #tpu.memory_space<vmem>>, vector<256x128xbf16>
    %c0_7 = arith.constant 0 : index
    %c0_8 = arith.constant 0 : index
    %13 = vector.load %arg8[%c0_7, %c0_8] : memref<2x128xf32, #tpu.memory_space<vmem>>, vector<2x128xf32>
    %14 = arith.truncf %11 : vector<2x256xf32> to vector<2x256xbf16>
    %cst_9 = arith.constant dense<0.000000e+00> : vector<2x128xf32>
    %15 = tpu.matmul %14, %12, %cst_9 {dimension_numbers = #tpu.dot_dimension_numbers<[1], [0], [0], [1], [0, 0, 1, 1], [], []>} : vector<2x256xbf16>, vector<256x128xbf16>, vector<2x128xf32> -> vector<2x128xf32>
    %16 = arith.addf %13, %15 : vector<2x128xf32>
    %c0_10 = arith.constant 0 : index
    %c0_11 = arith.constant 0 : index
    %17 = vector.load %arg8[%c0_10, %c0_11] : memref<2x128xf32, #tpu.memory_space<vmem>>, vector<2x128xf32>
    tpu.vector_store %arg8[%c0_10, %c0_11], %16 {strides = array<i32>} : memref<2x128xf32, #tpu.memory_space<vmem>>, vector<2x128xf32>,
    %c0_12 = arith.constant 0 : index
    %c0_13 = arith.constant 0 : index
    %18 = vector.load %arg9[%c0_12, %c0_13] : memref<2x128xf32, #tpu.memory_space<vmem>>, vector<2x128xf32>
    %19 = arith.truncf %5 : vector<2x256xf32> to vector<2x256xbf16>
    %cst_14 = arith.constant dense<0.000000e+00> : vector<2x128xf32>
    %20 = tpu.matmul %19, %12, %cst_14 {dimension_numbers = #tpu.dot_dimension_numbers<[1], [0], [0], [1], [0, 0, 1, 1], [], []>} : vector<2x256xbf16>, vector<256x128xbf16>, vector<2x128xf32> -> vector<2x128xf32>
    %21 = arith.addf %18, %20 : vector<2x128xf32>
    %c0_15 = arith.constant 0 : index
    %c0_16 = arith.constant 0 : index
    %22 = vector.load %arg9[%c0_15, %c0_16] : memref<2x128xf32, #tpu.memory_space<vmem>>, vector<2x128xf32>
    tpu.vector_store %arg9[%c0_15, %c0_16], %21 {strides = array<i32>} : memref<2x128xf32, #tpu.memory_space<vmem>>, vector<2x128xf32>,
    %c0_17 = arith.constant 0 : index
    %c0_18 = arith.constant 0 : index
    %23 = vector.load %arg10[%c0_17, %c0_18] : memref<1x1xf32, #tpu.memory_space<vmem>>, vector<1x1xf32>
    %24 = arith.mulf %4, %4 : vector<1x256xf32>
    %cst_19 = arith.constant dense<0.000000e+00> : vector<1xf32>
    %25 = vector.multi_reduction <add>, %24, %cst_19 [1] : vector<1x256xf32> to vector<1xf32>
    %26 = vector.shape_cast %25 : vector<1xf32> to vector<1x1xf32>
    %27 = arith.addf %23, %26 : vector<1x1xf32>
    %c0_20 = arith.constant 0 : index
    %c0_21 = arith.constant 0 : index
    %28 = vector.load %arg10[%c0_20, %c0_21] : memref<1x1xf32, #tpu.memory_space<vmem>>, vector<1x1xf32>
    tpu.vector_store %arg10[%c0_20, %c0_21], %27 {strides = array<i32>} : memref<1x1xf32, #tpu.memory_space<vmem>>, vector<1x1xf32>,
    %c2_i32 = arith.constant 2 : i32
    %29 = arith.cmpi eq, %arg0, %c2_i32 : i32
    %30 = arith.extui %29 : i1 to i32
    %c0_i32_22 = arith.constant 0 : i32
    %31 = arith.cmpi ne, %30, %c0_i32_22 : i32
    scf.if %31 {
      %c0_23 = arith.constant 0 : index
      %c0_24 = arith.constant 0 : index
      %32 = vector.load %arg4[%c0_23, %c0_24] : memref<1x128xf32, #tpu.memory_space<vmem>>, vector<1x128xf32>
      %c0_25 = arith.constant 0 : index
      %c0_26 = arith.constant 0 : index
      %33 = vector.load %arg8[%c0_25, %c0_26] : memref<2x128xf32, #tpu.memory_space<vmem>>, vector<2x128xf32>
      %34 = vector.broadcast %32 : vector<1x128xf32> to vector<2x128xf32>
      %35 = arith.addf %33, %34 : vector<2x128xf32>
      %c0_27 = arith.constant 0 : index
      %c0_28 = arith.constant 0 : index
      %36 = vector.load %arg9[%c0_27, %c0_28] : memref<2x128xf32, #tpu.memory_space<vmem>>, vector<2x128xf32>
      %37 = vector.broadcast %32 : vector<1x128xf32> to vector<2x128xf32>
      %38 = arith.addf %36, %37 : vector<2x128xf32>
      %39 = arith.mulf %35, %35 : vector<2x128xf32>
      %cst_29 = arith.constant dense<0.000000e+00> : vector<2xf32>
      %40 = vector.multi_reduction <add>, %39, %cst_29 [1] : vector<2x128xf32> to vector<2xf32>
      %41 = vector.shape_cast %40 : vector<2xf32> to vector<2x1xf32>
      %42 = math.rsqrt %41 : vector<2x1xf32>
      %43 = vector.broadcast %42 : vector<2x1xf32> to vector<2x128xf32>
      %44 = arith.mulf %35, %43 : vector<2x128xf32>
      %45 = arith.mulf %38, %38 : vector<2x128xf32>
      %cst_30 = arith.constant dense<0.000000e+00> : vector<2xf32>
      %46 = vector.multi_reduction <add>, %45, %cst_30 [1] : vector<2x128xf32> to vector<2xf32>
      %47 = vector.shape_cast %46 : vector<2xf32> to vector<2x1xf32>
      %48 = math.rsqrt %47 : vector<2x1xf32>
      %49 = vector.broadcast %48 : vector<2x1xf32> to vector<2x128xf32>
      %50 = arith.mulf %38, %49 : vector<2x128xf32>
      %51 = arith.mulf %44, %50 : vector<2x128xf32>
      %cst_31 = arith.constant dense<0.000000e+00> : vector<2xf32>
      %52 = vector.multi_reduction <add>, %51, %cst_31 [1] : vector<2x128xf32> to vector<2xf32>
      %53 = vector.shape_cast %52 : vector<2xf32> to vector<2x1xf32>
      %cst_32 = arith.constant dense<0.000000e+00> : vector<1xf32>
      %54 = vector.multi_reduction <add>, %53, %cst_32 [0] : vector<2x1xf32> to vector<1xf32>
      %55 = vector.shape_cast %54 : vector<1xf32> to vector<1x1xf32>
      %cst_33 = arith.constant 2.000000e+00 : f32
      %56 = vector.broadcast %cst_33 : f32 to vector<1x1xf32>
      %57 = arith.divf %55, %56 : vector<1x1xf32>
      %c0_34 = arith.constant 0 : index
      %c0_35 = arith.constant 0 : index
      %58 = vector.load %arg10[%c0_34, %c0_35] : memref<1x1xf32, #tpu.memory_space<vmem>>, vector<1x1xf32>
      %59 = math.sqrt %58 : vector<1x1xf32>
      %cst_36 = arith.constant 0.00999999977 : f32
      %60 = vector.broadcast %cst_36 : f32 to vector<1x1xf32>
      %61 = arith.mulf %60, %59 : vector<1x1xf32>
      %62 = arith.addf %57, %61 : vector<1x1xf32>
      %c0_37 = arith.constant 0 : index
      %c0_38 = arith.constant 0 : index
      %63 = vector.load %arg5[%c0_37, %c0_38] : memref<1x1xf32, #tpu.memory_space<vmem>>, vector<1x1xf32>
      tpu.vector_store %arg5[%c0_37, %c0_38], %62 {strides = array<i32>} : memref<1x1xf32, #tpu.memory_space<vmem>>, vector<1x1xf32>,
      %c0_39 = arith.constant 0 : index
      %c0_40 = arith.constant 0 : index
      %64 = vector.load %arg6[%c0_39, %c0_40] : memref<1x1xf32, #tpu.memory_space<vmem>>, vector<1x1xf32>
      tpu.vector_store %arg6[%c0_39, %c0_40], %57 {strides = array<i32>} : memref<1x1xf32, #tpu.memory_space<vmem>>, vector<1x1xf32>,
      %c0_41 = arith.constant 0 : index
      %c0_42 = arith.constant 0 : index
      %65 = vector.load %arg7[%c0_41, %c0_42] : memref<1x1xf32, #tpu.memory_space<vmem>>, vector<1x1xf32>
      tpu.vector_store %arg7[%c0_41, %c0_42], %59 {strides = array<i32>} : memref<1x1xf32, #tpu.memory_space<vmem>>, vector<1x1xf32>,
    } else {
    }
    return
  }
  func.func @transform_0(%arg0: i32) -> (i32, i32) {
    %c0_i32 = arith.constant 0 : i32
    %c0_i32_0 = arith.constant 0 : i32
    return %c0_i32, %arg0 : i32, i32
  }
  func.func @transform_1(%arg0: i32) -> (i32, i32) {
    %c0_i32 = arith.constant 0 : i32
    %c0_i32_0 = arith.constant 0 : i32
    return %c0_i32, %arg0 : i32, i32
  }
  func.func @transform_2(%arg0: i32) -> (i32, i32) {
    %c0_i32 = arith.constant 0 : i32
    %c0_i32_0 = arith.constant 0 : i32
    return %arg0, %c0_i32 : i32, i32
  }
  func.func @transform_3(%arg0: i32) -> (i32, i32) {
    %c0_i32 = arith.constant 0 : i32
    %c0_i32_0 = arith.constant 0 : i32
    %c0_i32_1 = arith.constant 0 : i32
    return %c0_i32, %c0_i32_0 : i32, i32
  }
  func.func @transform_4(%arg0: i32) -> (i32, i32) {
    %c0_i32 = arith.constant 0 : i32
    %c0_i32_0 = arith.constant 0 : i32
    %c0_i32_1 = arith.constant 0 : i32
    return %c0_i32, %c0_i32_0 : i32, i32
  }
  func.func @transform_5(%arg0: i32) -> (i32, i32) {
    %c0_i32 = arith.constant 0 : i32
    %c0_i32_0 = arith.constant 0 : i32
    %c0_i32_1 = arith.constant 0 : i32
    return %c0_i32, %c0_i32_0 : i32, i32
  }
  func.func @transform_6(%arg0: i32) -> (i32, i32) {
    %c0_i32 = arith.constant 0 : i32
    %c0_i32_0 = arith.constant 0 : i32
    %c0_i32_1 = arith.constant 0 : i32
    return %c0_i32, %c0_i32_0 : i32, i32
  }
}

</mosaic_0001>

<llo_original>
// kernel: tpu_custom_call.1
$region0: #{tpu_custom_call.1}
  #allocation0 [shape = 'u32[]', space=smem, size = 0x4, offset = 0x4, fixed_abs, tag = 'smem constant byte address 0x4 - core index']
  #allocation1 [shape = 'u32[144,128]{1,0:T(1,128)}', space=vmem, size = 0x12000, scoped, tag = 'internal scratch']
  #allocation2 [shape = 'f32[2,128]{1,0:T(2,128)}', space=vmem, size = 0x400, scoped, tag = 'scratch operand']
  #allocation3 [shape = 'f32[2,128]{1,0:T(2,128)}', space=vmem, size = 0x400, scoped, tag = 'scratch operand']
  #allocation4 [shape = 'f32[1,1]{1,0:T(1,128)}', space=vmem, size = 0x200, scoped, tag = 'scratch operand']
  %s0 = inlined_call_operand.hbm [shape: f32[2,768], index: 0, kind: input, shape index: {}]
  %s1 = inlined_call_operand.hbm [shape: f32[1,768], index: 1, kind: input, shape index: {}]
  %s2 = inlined_call_operand.hbm [shape: bf16[768,128], index: 2, kind: input, shape index: {}]
  %s3 = inlined_call_operand.vmem [shape: f32[1,128], index: 3, kind: input, shape index: {}]
  %s4 = inlined_call_operand.hbm [shape: f32[1,1], index: 4, kind: output, shape index: {0}]
  %s5 = inlined_call_operand.hbm [shape: f32[1,1], index: 5, kind: output, shape index: {1}]
  %s6 = inlined_call_operand.hbm [shape: f32[1,1], index: 6, kind: output, shape index: {2}]
  %7 = xla_tuple %s4, %s5, %s6
  %s8 = sld [smem:[#allocation0]]
  $region85: #{tpu_custom_call.1} parent=0
    _
  %s10 = ssub.s32 1, %s8
  %s11 = scalar_select 0, %s10, %s8
  $region1: #{tpu_custom_call.1} parent=0
    #allocation5 [shape = 'u8[4096]{0}', space=vmem, size = 0x1000, scoped, tag = 'input window, operand 0']
    #allocation6 [shape = 's32[2]{0}', space=sflag, size = 0x8, scoped, tag = 'scoped memory for tpu_custom_call.1']
    #allocation7 [shape = 's32[2]{0}', space=sflag, size = 0x8, scoped, tag = 'scoped memory for tpu_custom_call.1']
    #allocation8 [shape = 'u8[2048]{0}', space=vmem, size = 0x800, scoped, tag = 'input window, operand 1']
    #allocation9 [shape = 's32[2]{0}', space=sflag, size = 0x8, scoped, tag = 'scoped memory for tpu_custom_call.1']
    #allocation10 [shape = 'u8[131072]{0}', space=vmem, size = 0x20000, scoped, tag = 'input window, operand 2']
    #allocation11 [shape = 'u8[512]{0}', space=vmem, size = 0x400, scoped, tag = 'output window, operand 0, single buffered']
    #allocation12 [shape = 'u8[512]{0}', space=vmem, size = 0x400, scoped, tag = 'output window, operand 1, single buffered']
    #allocation13 [shape = 's32[1]{0}', space=sflag, size = 0x4, scoped, tag = 'scoped memory for tpu_custom_call.1']
    #allocation14 [shape = 'u8[512]{0}', space=vmem, size = 0x400, scoped, tag = 'output window, operand 2, single buffered']
    %12 = vsyncpa [#allocation6], 0
    %s13 = scalar_lea.sflag [#allocation6], 1
    %14 = vsyncpa %s13, 0
    %15 = vsyncpa [#allocation9], 0
    %s16 = scalar_lea.sflag [#allocation9], 1
    %17 = vsyncpa %s16, 0
    %18 = vsyncpa [#allocation7], 0
    %19 = vsyncpa [#allocation13], 0
    loop: start=0, step=1, limit=5
    $region2: #{tpu_custom_call.1} parent=1 // loop_pre_header
      _
    $region3: #{tpu_custom_call.1} parent=1 // loop_header
      %s21 = sphi 0, %s25
      %p22 = scmp.ge.s32.totalorder %s21, 5
      %s31 = sphi 0, %s33
      %s34 = sphi 0, %s31
      %s35 = sphi 0, %s34
      %s51 = sphi 0, %s35
      %s57 = sphi 0, %s59
      %s60 = sphi 0, %s57
      %s61 = sphi 0, %s60
      %s77 = sphi 0, %s61
      %s83 = sphi 0, %s85
      %s86 = sphi 0, %s83
      %s87 = sphi 0, %s86
      %s103 = sphi 0, %s87
      %s107 = sphi 0, %s107
      %s109 = sphi 0, %s107
      %s110 = sphi 0, %s109
      %s124 = sphi 0, %s110
      %s128 = sphi 0, %s128
      %s130 = sphi 0, %s128
      %s131 = sphi 0, %s130
      %s145 = sphi 0, %s131
      %s149 = sphi 0, %s149
      %s151 = sphi 0, %s149
      %s152 = sphi 0, %s151
      %s166 = sphi 0, %s152
      %s170 = sphi 0, %s170
      %s172 = sphi 0, %s170
      %s173 = sphi 0, %s172
      %s187 = sphi 0, %s173
    $region4: #{tpu_custom_call.1} parent=1 // loop_header_branch
      %24 = sbr.rel (%p22) target = $region8
    $region5: #{tpu_custom_call.1} parent=1 // loop_body
      %s26 = ssub.s32 %s21, 1
      %s27 = ssub.s32 %s21, 2
      %s28 = sadd.s32 %s21, 1
      %s29 = ssub.s32 %s21, %s28
      %p30 = scmp.eq.s32.totalorder %s29, 0
      %s32 = sadd.s32 %s31, 1
      %s33 = scalar_select %p30, %s31, %s32
      %p36 = pneg %p30
      %p37 = scmp.eq.s32.totalorder %s21, 2
      %p38 = por %p36, %p37
      %p39 = scmp.ne.s32.totalorder %s31, %s34
      %p40 = scmp.eq.s32.totalorder %s21, 0
      %p41 = por %p39, %p40
      %p42 = scmp.ne.s32.totalorder %s31, %s34
      %p43 = scmp.eq.s32.totalorder %s26, 2
      %p44 = por %p42, %p43
      %p45 = scmp.ne.s32.totalorder %s34, %s35
      %p46 = scmp.eq.s32.totalorder %s26, 0
      %p47 = por %p45, %p46
      %p48 = scmp.ne.s32.totalorder %s34, %s35
      %p49 = scmp.eq.s32.totalorder %s27, 2
      %p50 = por %p48, %p49
      %p52 = scmp.ne.s32.totalorder %s35, %s51
      %p53 = scmp.eq.s32.totalorder %s27, 0
      %p54 = por %p52, %p53
      %s55 = ssub.s32 %s21, %s28
      %p56 = scmp.eq.s32.totalorder %s55, 0
      %s58 = sadd.s32 %s57, 1
      %s59 = scalar_select %p56, %s57, %s58
      %p62 = pneg %p56
      %p63 = scmp.eq.s32.totalorder %s21, 2
      %p64 = por %p62, %p63
      %p65 = scmp.ne.s32.totalorder %s57, %s60
      %p66 = scmp.eq.s32.totalorder %s21, 0
      %p67 = por %p65, %p66
      %p68 = scmp.ne.s32.totalorder %s57, %s60
      %p69 = scmp.eq.s32.totalorder %s26, 2
      %p70 = por %p68, %p69
      %p71 = scmp.ne.s32.totalorder %s60, %s61
      %p72 = scmp.eq.s32.totalorder %s26, 0
      %p73 = por %p71, %p72
      %p74 = scmp.ne.s32.totalorder %s60, %s61
      %p75 = scmp.eq.s32.totalorder %s27, 2
      %p76 = por %p74, %p75
      %p78 = scmp.ne.s32.totalorder %s61, %s77
      %p79 = scmp.eq.s32.totalorder %s27, 0
      %p80 = por %p78, %p79
      %s81 = ssub.s32 %s21, %s28
      %p82 = scmp.eq.s32.totalorder %s81, 0
      %s84 = sadd.s32 %s83, 1
      %s85 = scalar_select %p82, %s83, %s84
      %p88 = pneg %p82
      %p89 = scmp.eq.s32.totalorder %s21, 2
      %p90 = por %p88, %p89
      %p91 = scmp.ne.s32.totalorder %s83, %s86
      %p92 = scmp.eq.s32.totalorder %s21, 0
      %p93 = por %p91, %p92
      %p94 = scmp.ne.s32.totalorder %s83, %s86
      %p95 = scmp.eq.s32.totalorder %s26, 2
      %p96 = por %p94, %p95
      %p97 = scmp.ne.s32.totalorder %s86, %s87
      %p98 = scmp.eq.s32.totalorder %s26, 0
      %p99 = por %p97, %p98
      %p100 = scmp.ne.s32.totalorder %s86, %s87
      %p101 = scmp.eq.s32.totalorder %s27, 2
      %p102 = por %p100, %p101
      %p104 = scmp.ne.s32.totalorder %s87, %s103
      %p105 = scmp.eq.s32.totalorder %s27, 0
      %p106 = por %p104, %p105
      %s108 = sadd.s32 %s107, 1
      %p111 = scmp.eq.s32.totalorder %s21, 2
      %p112 = scmp.ne.s32.totalorder %s107, %s109
      %p113 = scmp.eq.s32.totalorder %s21, 0
      %p114 = por %p112, %p113
      %p115 = scmp.ne.s32.totalorder %s107, %s109
      %p116 = scmp.eq.s32.totalorder %s26, 2
      %p117 = por %p115, %p116
      %p118 = scmp.ne.s32.totalorder %s109, %s110
      %p119 = scmp.eq.s32.totalorder %s26, 0
      %p120 = por %p118, %p119
      %p121 = scmp.ne.s32.totalorder %s109, %s110
      %p122 = scmp.eq.s32.totalorder %s27, 2
      %p123 = por %p121, %p122
      %p125 = scmp.ne.s32.totalorder %s110, %s124
      %p126 = scmp.eq.s32.totalorder %s27, 0
      %p127 = por %p125, %p126
      %s129 = sadd.s32 %s128, 1
      %p132 = scmp.eq.s32.totalorder %s21, 2
      %p133 = scmp.ne.s32.totalorder %s128, %s130
      %p134 = scmp.eq.s32.totalorder %s21, 0
      %p135 = por %p133, %p134
      %p136 = scmp.ne.s32.totalorder %s128, %s130
      %p137 = scmp.eq.s32.totalorder %s26, 2
      %p138 = por %p136, %p137
      %p139 = scmp.ne.s32.totalorder %s130, %s131
      %p140 = scmp.eq.s32.totalorder %s26, 0
      %p141 = por %p139, %p140
      %p142 = scmp.ne.s32.totalorder %s130, %s131
      %p143 = scmp.eq.s32.totalorder %s27, 2
      %p144 = por %p142, %p143
      %p146 = scmp.ne.s32.totalorder %s131, %s145
      %p147 = scmp.eq.s32.totalorder %s27, 0
      %p148 = por %p146, %p147
      %s150 = sadd.s32 %s149, 1
      %p153 = scmp.eq.s32.totalorder %s21, 2
      %p154 = scmp.ne.s32.totalorder %s149, %s151
      %p155 = scmp.eq.s32.totalorder %s21, 0
      %p156 = por %p154, %p155
      %p157 = scmp.ne.s32.totalorder %s149, %s151
      %p158 = scmp.eq.s32.totalorder %s26, 2
      %p159 = por %p157, %p158
      %p160 = scmp.ne.s32.totalorder %s151, %s152
      %p161 = scmp.eq.s32.totalorder %s26, 0
      %p162 = por %p160, %p161
      %p163 = scmp.ne.s32.totalorder %s151, %s152
      %p164 = scmp.eq.s32.totalorder %s27, 2
      %p165 = por %p163, %p164
      %p167 = scmp.ne.s32.totalorder %s152, %s166
      %p168 = scmp.eq.s32.totalorder %s27, 0
      %p169 = por %p167, %p168
      %s171 = sadd.s32 %s170, 1
      %p174 = scmp.eq.s32.totalorder %s21, 2
      %p175 = scmp.ne.s32.totalorder %s170, %s172
      %p176 = scmp.eq.s32.totalorder %s21, 0
      %p177 = por %p175, %p176
      %p178 = scmp.ne.s32.totalorder %s170, %s172
      %p179 = scmp.eq.s32.totalorder %s26, 2
      %p180 = por %p178, %p179
      %p181 = scmp.ne.s32.totalorder %s172, %s173
      %p182 = scmp.eq.s32.totalorder %s26, 0
      %p183 = por %p181, %p182
      %p184 = scmp.ne.s32.totalorder %s172, %s173
      %p185 = scmp.eq.s32.totalorder %s27, 2
      %p186 = por %p184, %p185
      %p188 = scmp.ne.s32.totalorder %s173, %s187
      %p189 = scmp.eq.s32.totalorder %s27, 0
      %p190 = por %p188, %p189
      %p191 = scmp.le.s32.totalorder 1, %s21
      %p192 = scmp.lt.s32.totalorder %s21, 4
      %p193 = pnand %p191, %p192
      %p194 = pneg %p193
      // Predicated region
      $region9: #{tpu_custom_call.1} parent=5 // pred_check
        _
      $region10: #{tpu_custom_call.1} parent=5 // pred_check_branch
        %196 = sbr.rel (%p193) target = $region12
      $region11: #{tpu_custom_call.1} parent=5 // pred_region
        %s197 = ssub.s32 %s21, 1
        // Predicated region
        $region13: #{tpu_custom_call.1} parent=11 // pred_check
          %p198 = pneg %p120
        $region14: #{tpu_custom_call.1} parent=11 // pred_check_branch
          %200 = sbr.rel (%p198) target = $region16
        $region15: #{tpu_custom_call.1} parent=11 // pred_region
          _
        $region16: #{tpu_custom_call.1} parent=11 // pred_fallthru
          _
      $region12: #{tpu_custom_call.1} parent=5 // pred_fallthru
        _
      %p201 = scmp.lt.s32.totalorder %s21, 3
      // Predicated region
      $region17: #{tpu_custom_call.1} parent=5 // pred_check
        %p202 = pneg %p201
      $region18: #{tpu_custom_call.1} parent=5 // pred_check_branch
        %204 = sbr.rel (%p202) target = $region20
      $region19: #{tpu_custom_call.1} parent=5 // pred_region
        // Predicated region
        $region21: #{tpu_custom_call.1} parent=19 // pred_check
          %p205 = pneg %p41
        $region22: #{tpu_custom_call.1} parent=19 // pred_check_branch
          %207 = sbr.rel (%p205) target = $region24
        $region23: #{tpu_custom_call.1} parent=19 // pred_region
          %s208 = sand.u32 %s31, 1
          %s209 = scalar_lea.sflag [#allocation6], %s208
          %s210 = sand.u32 %s31, 1
          %s211 = smul.addr %s210, 4
          %s212 = scalar_lea.vmem [#allocation5], %s211
          %s213 = smul.u32 2, %s21
          %s215 = ssub.s32 64, 64
          %216 = vsyncadd %s209, %s215
          %s217 = smul.addr %s213, 32
          %s218 = scalar_lea.hbm %s0, %s217
          %s220 = sshll.u32 %s212, 4
          %s221 = int_to_ptr.vmem [resolvable:$true] %s220
          %223 = dma.hbm_to_vmem [thread:$0]  %s218, 64, %s221, %s209
        $region24: #{tpu_custom_call.1} parent=19 // pred_fallthru
          _
        // Predicated region
        $region25: #{tpu_custom_call.1} parent=19 // pred_check
          %p224 = pneg %p67
        $region26: #{tpu_custom_call.1} parent=19 // pred_check_branch
          %226 = sbr.rel (%p224) target = $region28
        $region27: #{tpu_custom_call.1} parent=19 // pred_region
          %s227 = sand.u32 %s21, 1
          %s228 = scalar_lea.sflag [#allocation9], %s227
          %s229 = sand.u32 %s57, 1
          %s230 = smul.addr %s229, 2
          %s231 = scalar_lea.vmem [#allocation8], %s230
          %s232 = smul.u32 2, %s21
          %s234 = ssub.s32 32, 32
          %235 = vsyncadd %s228, %s234
          %s236 = smul.addr %s232, 16
          %s237 = scalar_lea.hbm %s1, %s236
          %s239 = sshll.u32 %s231, 4
          %s240 = int_to_ptr.vmem [resolvable:$true] %s239
          %242 = dma.hbm_to_vmem [thread:$0]  %s237, 32, %s240, %s228
        $region28: #{tpu_custom_call.1} parent=19 // pred_fallthru
          _
        // Predicated region
        $region29: #{tpu_custom_call.1} parent=19 // pred_check
          %p243 = pneg %p93
        $region30: #{tpu_custom_call.1} parent=19 // pred_check_branch
          %245 = sbr.rel (%p243) target = $region32
        $region31: #{tpu_custom_call.1} parent=19 // pred_region
          %s246 = sand.u32 %s21, 1
          %s247 = scalar_lea.sflag [#allocation9], %s246
          %s248 = sand.u32 %s83, 1
          %s249 = smul.addr %s248, 128
          %s250 = scalar_lea.vmem [#allocation10], %s249
          %s251 = smul.u32 32, %s21
          %s253 = ssub.s32 2048, 2048
          %254 = vsyncadd %s247, %s253
          %s255 = smul.addr %s251, 64
          %s256 = scalar_lea.hbm %s2, %s255
          %s257 = sshll.u32 %s250, 4
          %s258 = int_to_ptr.vmem [resolvable:$true] %s257
          %263 = dma.hbm_to_vmem [thread:$0]  %s256, 2048, %s258, %s247, 64, 64, 4
        $region32: #{tpu_custom_call.1} parent=19 // pred_fallthru
          _
      $region20: #{tpu_custom_call.1} parent=5 // pred_fallthru
        _
      %p264 = scmp.le.s32.totalorder 1, %s21
      %p265 = scmp.lt.s32.totalorder %s21, 4
      %p266 = pnand %p264, %p265
      %p267 = pneg %p266
      // Predicated region
      $region33: #{tpu_custom_call.1} parent=5 // pred_check
        _
      $region34: #{tpu_custom_call.1} parent=5 // pred_check_branch
        %269 = sbr.rel (%p266) target = $region36
      $region35: #{tpu_custom_call.1} parent=5 // pred_region
        %s270 = ssub.s32 %s21, 1
        %s271 = sand.u32 %s34, 1
        %s272 = scalar_lea.sflag [#allocation6], %s271
        %s273 = sand.u32 %s34, 1
        %s274 = smul.addr %s273, 4
        %s275 = scalar_lea.vmem [#allocation5], %s274
        // Predicated region
        $region37: #{tpu_custom_call.1} parent=35 // pred_check
          %p276 = pneg %p47
        $region38: #{tpu_custom_call.1} parent=35 // pred_check_branch
          %278 = sbr.rel (%p276) target = $region40
        $region39: #{tpu_custom_call.1} parent=35 // pred_region
          %279 = dma.done %s272, 64
        $region40: #{tpu_custom_call.1} parent=35 // pred_fallthru
          _
        %s280 = sand.u32 %s26, 1
        %s281 = scalar_lea.sflag [#allocation9], %s280
        %s282 = sand.u32 %s60, 1
        %s283 = smul.addr %s282, 2
        %s284 = scalar_lea.vmem [#allocation8], %s283
        // Predicated region
        $region41: #{tpu_custom_call.1} parent=35 // pred_check
          %p285 = pneg %p73
        $region42: #{tpu_custom_call.1} parent=35 // pred_check_branch
          %287 = sbr.rel (%p285) target = $region44
        $region43: #{tpu_custom_call.1} parent=35 // pred_region
          %288 = dma.done %s281, 32
        $region44: #{tpu_custom_call.1} parent=35 // pred_fallthru
          _
        %s289 = sand.u32 %s26, 1
        %s290 = scalar_lea.sflag [#allocation9], %s289
        %s291 = sand.u32 %s86, 1
        %s292 = smul.addr %s291, 128
        %s293 = scalar_lea.vmem [#allocation10], %s292
        // Predicated region
        $region45: #{tpu_custom_call.1} parent=35 // pred_check
          %p294 = pneg %p99
        $region46: #{tpu_custom_call.1} parent=35 // pred_check_branch
          %296 = sbr.rel (%p294) target = $region48
        $region47: #{tpu_custom_call.1} parent=35 // pred_region
          %297 = dma.done %s290, 2048
        $region48: #{tpu_custom_call.1} parent=35 // pred_fallthru
          _
        %s298 = sand.u32 %s34, 1
        %s299 = scalar_lea.sflag [#allocation6], %s298
        %s300 = sand.u32 %s34, 1
        %s301 = smul.addr %s300, 4
        %s302 = scalar_lea.vmem [#allocation5], %s301
        %p303 = pneg %p47
        %p304 = pneg %p44
        %s305 = sand.u32 %s26, 1
        %s306 = scalar_lea.sflag [#allocation9], %s305
        %s307 = sand.u32 %s60, 1
        %s308 = smul.addr %s307, 2
        %s309 = scalar_lea.vmem [#allocation8], %s308
        %p310 = pneg %p73
        %p311 = pneg %p70
        %s312 = sand.u32 %s26, 1
        %s313 = scalar_lea.sflag [#allocation9], %s312
        %s314 = sand.u32 %s86, 1
        %s315 = smul.addr %s314, 128
        %s316 = scalar_lea.vmem [#allocation10], %s315
        %p317 = pneg %p99
        %p318 = pneg %p96
        %p319 = pneg %p120
        %p320 = pneg %p117
        %p321 = pneg %p141
        %p322 = pneg %p138
        %p323 = pneg %p162
        %p324 = pneg %p159
        %p325 = pneg %p183
        %p326 = pneg %p180
        %s327 = smul.u32 2, %s26
        %s328 = smul.u32 2, %s26
        %s329 = smul.u32 32, %s26
        %p331 = scmp.eq.s32.totalorder %s26, 0
        // Predicated region
        $region49: #{tpu_custom_call.1} parent=35 // pred_check
          %p332 = pneg %p331
        $region50: #{tpu_custom_call.1} parent=35 // pred_check_branch
          %334 = sbr.rel (%p332) target = $region52
        $region51: #{tpu_custom_call.1} parent=35 // pred_region
          %335 = vst [vmem:[#allocation2] sm:$0x3] 0.0
          %336 = vst [vmem:[#allocation3] sm:$0x3] 0.0
          %vm337 = vcmask 0
          %338 = vst.msk [vmem:[#allocation4] sm:$0x1] %vm337, 0.0
        $region52: #{tpu_custom_call.1} parent=35 // pred_fallthru
          _
        %v339 = vld [vmem:[%s284] sm:$0x3]
        %v340 = vtanh.pop %v339
        %v341 = vld [vmem:[%s275] sm:$0xf]
        %v343 = vlaneseq
        %v344 = vshrl.u32 %v343, 7
        %v345 = vsub.s32 0, %v344
        %v346 = vrot.slane %v340, %v345
        %v347 = vlaneseq
        %v348 = vshrl.u32 %v347, 7
        %v349 = vsub.s32 1, %v348
        %v350 = vrot.slane %v340, %v349
        %v351 = vcombine.low %v346, %v350
        %v353 = vunpack.c.l.s4 1983009808
        %v354 = vunpack.c.0.s8 %v353
        %v355 = vlaneseq
        %v356 = vshrl.u32 %v355, 7
        %v357 = vsub.s32 %v354, %v356
        %v358 = vrot.slane %v351, %v357
        %v360 = vadd.f32 %v341, %v358
        %v361 = vmax.f32 %v360, 0.0
        %v362 = vmin.f32 %v361, 1.0
        %v363 = vld [vmem:[%s293] sm:$0xf]
        %v364 = vld [vmem:[%s293 + $0x4] sm:$0xf]
        %v365 = vld [vmem:[%s293 + $0x8] sm:$0xf]
        %v366 = vld [vmem:[%s293 + $0xc] sm:$0xf]
        %v367 = vld [vmem:[%s293 + $0x10] sm:$0xf]
        %v368 = vld [vmem:[%s293 + $0x14] sm:$0xf]
        %v369 = vld [vmem:[%s293 + $0x18] sm:$0xf]
        %v370 = vld [vmem:[%s293 + $0x1c] sm:$0xf]
        %v371 = vld [vmem:[%s293 + $0x20] sm:$0xf]
        %v372 = vld [vmem:[%s293 + $0x24] sm:$0xf]
        %v373 = vld [vmem:[%s293 + $0x28] sm:$0xf]
        %v374 = vld [vmem:[%s293 + $0x2c] sm:$0xf]
        %v375 = vld [vmem:[%s293 + $0x30] sm:$0xf]
        %v376 = vld [vmem:[%s293 + $0x34] sm:$0xf]
        %v377 = vld [vmem:[%s293 + $0x38] sm:$0xf]
        %v378 = vld [vmem:[%s293 + $0x3c] sm:$0xf]
        %v379 = vld [vmem:[%s293 + $0x40] sm:$0xf]
        %v380 = vld [vmem:[%s293 + $0x44] sm:$0xf]
        %v381 = vld [vmem:[%s293 + $0x48] sm:$0xf]
        %v382 = vld [vmem:[%s293 + $0x4c] sm:$0xf]
        %v383 = vld [vmem:[%s293 + $0x50] sm:$0xf]
        %v384 = vld [vmem:[%s293 + $0x54] sm:$0xf]
        %v385 = vld [vmem:[%s293 + $0x58] sm:$0xf]
        %v386 = vld [vmem:[%s293 + $0x5c] sm:$0xf]
        %v387 = vld [vmem:[%s293 + $0x60] sm:$0xf]
        %v388 = vld [vmem:[%s293 + $0x64] sm:$0xf]
        %v389 = vld [vmem:[%s293 + $0x68] sm:$0xf]
        %v390 = vld [vmem:[%s293 + $0x6c] sm:$0xf]
        %v391 = vld [vmem:[%s293 + $0x70] sm:$0xf]
        %v392 = vld [vmem:[%s293 + $0x74] sm:$0xf]
        %v393 = vld [vmem:[%s293 + $0x78] sm:$0xf]
        %v394 = vld [vmem:[%s293 + $0x7c] sm:$0xf]
        %v395 = vld [vmem:[#allocation2] sm:$0x3]
        %v398 = vunpack.c.l.s4 1983009808
        %v399 = vunpack.c.0.s8 %v398
        %v400 = vlaneseq
        %v401 = vshrl.u32 %v400, 7
        %v402 = vsub.s32 %v399, %v401
        %v403 = vrot.slane %v362, %v402
        %v404 = vcombine.high %v403, %v403
        %v407 = vpack.c.bf16 %v403, %v403
        %v408 = vpack.c.bf16 %v404, %v404
        %v441 = vunpack.c.l.b16 %v363
        %v442 = vunpack.c.l.b16 %v364
        %v443 = vunpack.c.l.b16 %v365
        %v444 = vunpack.c.l.b16 %v366
        %v445 = vunpack.c.l.b16 %v367
        %v446 = vunpack.c.l.b16 %v368
        %v447 = vunpack.c.l.b16 %v369
        %v448 = vunpack.c.l.b16 %v370
        %v449 = vunpack.c.l.b16 %v371
        %v450 = vunpack.c.l.b16 %v372
        %v451 = vunpack.c.l.b16 %v373
        %v452 = vunpack.c.l.b16 %v374
        %v453 = vunpack.c.l.b16 %v375
        %v454 = vunpack.c.l.b16 %v376
        %v455 = vunpack.c.l.b16 %v377
        %v456 = vunpack.c.l.b16 %v378
        %v457 = vunpack.c.l.b16 %v379
        %v458 = vunpack.c.l.b16 %v380
        %v459 = vunpack.c.l.b16 %v381
        %v460 = vunpack.c.l.b16 %v382
        %v461 = vunpack.c.l.b16 %v383
        %v462 = vunpack.c.l.b16 %v384
        %v463 = vunpack.c.l.b16 %v385
        %v464 = vunpack.c.l.b16 %v386
        %v465 = vunpack.c.l.b16 %v387
        %v466 = vunpack.c.l.b16 %v388
        %v467 = vunpack.c.l.b16 %v389
        %v468 = vunpack.c.l.b16 %v390
        %v469 = vunpack.c.l.b16 %v391
        %v470 = vunpack.c.l.b16 %v392
        %v471 = vunpack.c.l.b16 %v393
        %v472 = vunpack.c.l.b16 %v394
        %v473 = vpack.c.b16 %v442, %v441
        %v474 = vpack.c.b16 %v444, %v443
        %v475 = vpack.c.b16 %v446, %v445
        %v476 = vpack.c.b16 %v448, %v447
        %v477 = vpack.c.b16 %v450, %v449
        %v478 = vpack.c.b16 %v452, %v451
        %v479 = vpack.c.b16 %v454, %v453
        %v480 = vpack.c.b16 %v456, %v455
        %v481 = vpack.c.b16 %v458, %v457
        %v482 = vpack.c.b16 %v460, %v459
        %v483 = vpack.c.b16 %v462, %v461
        %v484 = vpack.c.b16 %v464, %v463
        %v485 = vpack.c.b16 %v466, %v465
        %v486 = vpack.c.b16 %v468, %v467
        %v487 = vpack.c.b16 %v470, %v469
        %v488 = vpack.c.b16 %v472, %v471
        %505 = vmatprep.subr.bf16.mxu0 0
        %506 = vmatpush1.bf16.msra.mxu0 %v473
        %507 = vmatprep.subr.bf16.mxu0 0
        %508 = vmatpush1.bf16.msra.mxu0 %v474
        %509 = vmatprep.subr.bf16.mxu0 0
        %510 = vmatpush1.bf16.msra.mxu0 %v475
        %511 = vmatprep.subr.bf16.mxu0 0
        %512 = vmatpush1.bf16.msra.mxu0 %v476
        %513 = vmatprep.subr.bf16.mxu0 0
        %514 = vmatpush1.bf16.msra.mxu0 %v477
        %515 = vmatprep.subr.bf16.mxu0 0
        %516 = vmatpush1.bf16.msra.mxu0 %v478
        %517 = vmatprep.subr.bf16.mxu0 0
        %518 = vmatpush1.bf16.msra.mxu0 %v479
        %519 = vmatprep.subr.bf16.mxu0 0
        %520 = vmatpush1.bf16.msra.mxu0 %v480
        %521 = vmatprep.subr.bf16.mxu0 0
        %522 = vmatpush1.bf16.msra.mxu0 %v481
        %523 = vmatprep.subr.bf16.mxu0 0
        %524 = vmatpush1.bf16.msra.mxu0 %v482
        %525 = vmatprep.subr.bf16.mxu0 0
        %526 = vmatpush1.bf16.msra.mxu0 %v483
        %527 = vmatprep.subr.bf16.mxu0 0
        %528 = vmatpush1.bf16.msra.mxu0 %v484
        %529 = vmatprep.subr.bf16.mxu0 0
        %530 = vmatpush1.bf16.msra.mxu0 %v485
        %531 = vmatprep.subr.bf16.mxu0 0
        %532 = vmatpush1.bf16.msra.mxu0 %v486
        %533 = vmatprep.subr.bf16.mxu0 0
        %534 = vmatpush1.bf16.msra.mxu0 %v487
        %535 = vmatprep.subr.bf16.mxu0 0
        %536 = vmatpush1.bf16.msra.mxu0 %v488
        %537 = vmatprep.mubr.bf16.mxu0 %v408
        %538 = vmatmul.mubr.bf16.gmra.mrb[0].mxu0 %v407
        %v539 = vpop.f32.mrb[0].mxu0
        %v540 = vadd.f32 0.0, %v539
        %v541 = vpop.f32.mrb[0].mxu0
        %v542 = vpop.f32.mrb[0].mxu0
        %v543 = vpop.f32.mrb[0].mxu0
        %544 = vdwg.mxu0
        %v545 = vadd.f32 %v395, %v540
        %546 = vst [vmem:[#allocation2] sm:$0x3] %v545
        %v547 = vld [vmem:[#allocation3] sm:$0x3]
        %v550 = vunpack.c.l.s4 1983009808
        %v551 = vunpack.c.0.s8 %v550
        %v552 = vlaneseq
        %v553 = vshrl.u32 %v552, 7
        %v554 = vsub.s32 %v551, %v553
        %v555 = vrot.slane %v341, %v554
        %v556 = vcombine.high %v555, %v555
        %v559 = vpack.c.bf16 %v555, %v555
        %v560 = vpack.c.bf16 %v556, %v556
        %561 = vmatprep.subr.bf16.mxu0 0
        %562 = vmatpush1.bf16.msra.mxu0 %v473
        %563 = vmatprep.subr.bf16.mxu0 0
        %564 = vmatpush1.bf16.msra.mxu0 %v474
        %565 = vmatprep.subr.bf16.mxu0 0
        %566 = vmatpush1.bf16.msra.mxu0 %v475
        %567 = vmatprep.subr.bf16.mxu0 0
        %568 = vmatpush1.bf16.msra.mxu0 %v476
        %569 = vmatprep.subr.bf16.mxu0 0
        %570 = vmatpush1.bf16.msra.mxu0 %v477
        %571 = vmatprep.subr.bf16.mxu0 0
        %572 = vmatpush1.bf16.msra.mxu0 %v478
        %573 = vmatprep.subr.bf16.mxu0 0
        %574 = vmatpush1.bf16.msra.mxu0 %v479
        %575 = vmatprep.subr.bf16.mxu0 0
        %576 = vmatpush1.bf16.msra.mxu0 %v480
        %577 = vmatprep.subr.bf16.mxu0 0
        %578 = vmatpush1.bf16.msra.mxu0 %v481
        %579 = vmatprep.subr.bf16.mxu0 0
        %580 = vmatpush1.bf16.msra.mxu0 %v482
        %581 = vmatprep.subr.bf16.mxu0 0
        %582 = vmatpush1.bf16.msra.mxu0 %v483
        %583 = vmatprep.subr.bf16.mxu0 0
        %584 = vmatpush1.bf16.msra.mxu0 %v484
        %585 = vmatprep.subr.bf16.mxu0 0
        %586 = vmatpush1.bf16.msra.mxu0 %v485
        %587 = vmatprep.subr.bf16.mxu0 0
        %588 = vmatpush1.bf16.msra.mxu0 %v486
        %589 = vmatprep.subr.bf16.mxu0 0
        %590 = vmatpush1.bf16.msra.mxu0 %v487
        %591 = vmatprep.subr.bf16.mxu0 0
        %592 = vmatpush1.bf16.msra.mxu0 %v488
        %593 = vmatprep.mubr.bf16.mxu0 %v560
        %594 = vmatmul.mubr.bf16.gmra.mrb[0].mxu0 %v559
        %v595 = vpop.f32.mrb[0].mxu0
        %v596 = vadd.f32 0.0, %v595
        %v597 = vpop.f32.mrb[0].mxu0
        %v598 = vpop.f32.mrb[0].mxu0
        %v599 = vpop.f32.mrb[0].mxu0
        %600 = vdwg.mxu0
        %v601 = vadd.f32 %v547, %v596
        %602 = vst [vmem:[#allocation3] sm:$0x3] %v601
        %v603 = vld [vmem:[#allocation4] sm:$0x1]
        %v604 = vmul.f32 %v340, %v340
        %v606 = vlaneseq
        %v607 = vshrl.u32 %v606, 7
        %v608 = vsub.s32 0, %v607
        %v609 = vrot.slane %v604, %v608
        %v610 = vlaneseq
        %v611 = vshrl.u32 %v610, 7
        %v612 = vsub.s32 1, %v611
        %v613 = vrot.slane %v604, %v612
        %vm616 = vcmask 1040384
        %v617 = vsel %vm616, %v609, 0.0
        %v618 = vsel %vm616, %v613, 0.0
        %v619 = vadd.f32 %v617, %v618
        %620 = vadd.xlane.f32.xlu0 %v619
        %v621 = vpop.xlane.xlu0 %620
        %v622 = vadd.f32 %v603, %v621
        %vm623 = vcmask 0
        %624 = vst.msk [vmem:[#allocation4] sm:$0x1] %vm623, %v622
        %p625 = scmp.eq.s32.totalorder %s26, 2
        // Predicated region
        $region53: #{tpu_custom_call.1} parent=35 // pred_check
          %p626 = pneg %p625
        $region54: #{tpu_custom_call.1} parent=35 // pred_check_branch
          %628 = sbr.rel (%p626) target = $region56
        $region55: #{tpu_custom_call.1} parent=35 // pred_region
          %v629 = vld [vmem:[%s3] sm:$0x1]
          %v630 = vld [vmem:[#allocation2] sm:$0x3]
          %v632 = vlaneseq
          %v633 = vshrl.u32 %v632, 7
          %v634 = vsub.s32 0, %v633
          %v635 = vrot.slane %v629, %v634
          %v637 = vadd.f32 %v630, %v635
          %v638 = vld [vmem:[#allocation3] sm:$0x3]
          %v639 = vadd.f32 %v638, %v635
          %v640 = vmul.f32 %v637, %v637
          %vm641 = vcmask 1041408
          %v642 = vsel %vm641, %v640, 0.0
          %643 = vadd.xlane.f32.xlu0 %v642
          %v644 = vpop.xlane.xlu0 %643
          %v645 = vrsqrt.pop %v644
          %v646 = vmul.f32 %v637, %v645
          %v647 = vmul.f32 %v639, %v639
          %v648 = vsel %vm641, %v647, 0.0
          %649 = vadd.xlane.f32.xlu0 %v648
          %v650 = vpop.xlane.xlu0 %649
          %v651 = vrsqrt.pop %v650
          %v652 = vmul.f32 %v639, %v651
          %v653 = vmul.f32 %v646, %v652
          %v654 = vsel %vm641, %v653, 0.0
          %655 = vadd.xlane.f32.xlu0 %v654
          %v656 = vpop.xlane.xlu0 %655
          %v657 = vsel %vm641, %v656, 0.0
          %v658 = vrot.slane %v657, 4
          %v659 = vadd.f32 %v657, %v658
          %v660 = vrot.slane %v659, 2
          %v661 = vadd.f32 %v659, %v660
          %v662 = vrot.slane %v661, 1
          %v663 = vadd.f32 %v661, %v662
          %v664 = vrcp.pop 2.0
          %v665 = vmul.f32 %v663, %v664
          %v666 = vld [vmem:[#allocation4] sm:$0x1]
          %v667 = vrsqrt.pop %v666
          %v668 = vmul.f32 %v666, %v667
          %vm669 = vcmp.eq.f32.partialorder %v666, inf
          %v670 = vsel %vm669, %v666, %v668
          %vm671 = vcmp.eq.f32.partialorder %v666, 0.0
          %v672 = vand.u32 %v666, 2147483648
          %v673 = vsel %vm671, %v672, %v670
          %v674 = vmul.f32 %v673, 0.01
          %v675 = vadd.f32 %v665, %v674
          %676 = vst.msk [vmem:[#allocation11] sm:$0x1] %vm623, %v675
          %677 = vst.msk [vmem:[#allocation12] sm:$0x1] %vm623, %v665
          %678 = vst.msk [vmem:[#allocation14] sm:$0x1] %vm623, %v673
        $region56: #{tpu_custom_call.1} parent=35 // pred_fallthru
          _
        // Predicated region
        $region57: #{tpu_custom_call.1} parent=35 // pred_check
          %p679 = pneg %p138
        $region58: #{tpu_custom_call.1} parent=35 // pred_check_branch
          %681 = sbr.rel (%p679) target = $region60
        $region59: #{tpu_custom_call.1} parent=35 // pred_region
          %s683 = ssub.s32 16, 16
          %684 = vsyncadd [#allocation7], %s683
          %s686 = sshll.u32 [#allocation11], 4
          %s687 = int_to_ptr.vmem [resolvable:$true] %s686
          %689 = dma.vmem_to_hbm [thread:$0]  %s687, 16, %s4, [#allocation7]
        $region60: #{tpu_custom_call.1} parent=35 // pred_fallthru
          _
        // Predicated region
        $region61: #{tpu_custom_call.1} parent=35 // pred_check
          %p690 = pneg %p159
        $region62: #{tpu_custom_call.1} parent=35 // pred_check_branch
          %692 = sbr.rel (%p690) target = $region64
        $region63: #{tpu_custom_call.1} parent=35 // pred_region
          %s694 = ssub.s32 16, 16
          %695 = vsyncadd [#allocation13], %s694
          %s697 = sshll.u32 [#allocation12], 4
          %s698 = int_to_ptr.vmem [resolvable:$true] %s697
          %700 = dma.vmem_to_hbm [thread:$0]  %s698, 16, %s5, [#allocation13]
        $region64: #{tpu_custom_call.1} parent=35 // pred_fallthru
          _
        // Predicated region
        $region65: #{tpu_custom_call.1} parent=35 // pred_check
          %p701 = pneg %p180
        $region66: #{tpu_custom_call.1} parent=35 // pred_check_branch
          %703 = sbr.rel (%p701) target = $region68
        $region67: #{tpu_custom_call.1} parent=35 // pred_region
          %s705 = ssub.s32 16, 16
          %706 = vsyncadd [#allocation13], %s705
          %s708 = sshll.u32 [#allocation14], 4
          %s709 = int_to_ptr.vmem [resolvable:$true] %s708
          %711 = dma.vmem_to_hbm [thread:$0]  %s709, 16, %s6, [#allocation13]
        $region68: #{tpu_custom_call.1} parent=35 // pred_fallthru
          _
        // Predicated region
        $region69: #{tpu_custom_call.1} parent=35 // pred_check
          %p712 = pneg %p138
        $region70: #{tpu_custom_call.1} parent=35 // pred_check_branch
          %714 = sbr.rel (%p712) target = $region72
        $region71: #{tpu_custom_call.1} parent=35 // pred_region
          %715 = dma.done [#allocation7], 16
        $region72: #{tpu_custom_call.1} parent=35 // pred_fallthru
          _
        // Predicated region
        $region73: #{tpu_custom_call.1} parent=35 // pred_check
          %p716 = pneg %p159
        $region74: #{tpu_custom_call.1} parent=35 // pred_check_branch
          %718 = sbr.rel (%p716) target = $region76
        $region75: #{tpu_custom_call.1} parent=35 // pred_region
          %719 = dma.done [#allocation13], 16
        $region76: #{tpu_custom_call.1} parent=35 // pred_fallthru
          _
        // Predicated region
        $region77: #{tpu_custom_call.1} parent=35 // pred_check
          %p720 = pneg %p180
        $region78: #{tpu_custom_call.1} parent=35 // pred_check_branch
          %722 = sbr.rel (%p720) target = $region80
        $region79: #{tpu_custom_call.1} parent=35 // pred_region
          %723 = dma.done [#allocation13], 16
        $region80: #{tpu_custom_call.1} parent=35 // pred_fallthru
          _
      $region36: #{tpu_custom_call.1} parent=5 // pred_fallthru
        _
      %p724 = scmp.le.s32.totalorder 2, %s21
      // Predicated region
      $region81: #{tpu_custom_call.1} parent=5 // pred_check
        %p725 = pneg %p724
      $region82: #{tpu_custom_call.1} parent=5 // pred_check_branch
        %727 = sbr.rel (%p725) target = $region84
      $region83: #{tpu_custom_call.1} parent=5 // pred_region
        %s728 = ssub.s32 %s21, 2
      $region84: #{tpu_custom_call.1} parent=5 // pred_fallthru
        _
    $region6: #{tpu_custom_call.1} parent=1 // loop_footer
      %s25 = sadd.s32 1, %s21
    $region7: #{tpu_custom_call.1} parent=1 // loop_footer_branch
      %20 = sbr.rel target = $region3
    $region8: #{tpu_custom_call.1} parent=1 // loop_exit
      _
    %729 = vsyncpa [#allocation6], 1
    %s730 = scalar_lea.sflag [#allocation6], 1
    %731 = vsyncpa %s730, 1
    %732 = vsyncpa [#allocation9], 1
    %s733 = scalar_lea.sflag [#allocation9], 1
    %734 = vsyncpa %s733, 1
    %735 = vsyncpa [#allocation7], 1
    %s736 = scalar_lea.sflag [#allocation7], 1
    %737 = vsyncpa %s736, 1
    %738 = vsyncpa [#allocation13], 1

</llo_original>
